<compile_context>
chip_gen: v5e
topology: v5e:2x2
jax: 0.10.0
libtpu: 0.0.40
codegen_flags: <defaults>
</compile_context>

<pallas_src>
import functools

import jax
import jax.numpy as jnp
from jax.experimental import pallas as pl
from jax.experimental.pallas import tpu as pltpu


def _round_up(x, m):
    return (x + m - 1) // m * m


# ----------------------------- Pallas kernel -------------------------------
def _gcn_fused_kernel(a_ref, x_ref, w_ref, o_ref, *, num_layers):
    # a_ref: (Np, Np)      bf16 -- normalized adjacency, zero-padded
    # x_ref: (Np, Fp)      f32  -- node features, zero-padded
    # w_ref: (L, Fp, Fp)   f32  -- per-layer weights, zero-padded
    # o_ref: (Np, Fp)      f32  -- final-layer activations, zero-padded
    a = a_ref[...]
    h = x_ref[...]
    for i in range(num_layers):            # static unroll over layers
        w = w_ref[i]
        # X @ W once per layer, then bf16 A-propagation with f32 accumulation.
        xw = jnp.dot(h, w, preferred_element_type=jnp.float32)
        h = jnp.dot(a, xw.astype(jnp.bfloat16),
                    preferred_element_type=jnp.float32)
        if i != num_layers - 1:
            h = jnp.maximum(h, 0.0)         # fused ReLU epilogue (f32 VPU)
        # dropout (eval) and batch_norm('None') are identities
    o_ref[...] = h.astype(o_ref.dtype)


def gcn_layers_fused(a_pad, x_pad, w_pad):
    """All GCNConv layers in a single pallas_call; everything resident in VMEM."""
    num_layers, f_pad, _ = w_pad.shape
    n_pad = x_pad.shape[0]
    kernel = functools.partial(_gcn_fused_kernel, num_layers=num_layers)
    return pl.pallas_call(
        kernel,
        out_shape=jax.ShapeDtypeStruct((n_pad, f_pad), jnp.float32),
        grid_spec=pltpu.PrefetchScalarGridSpec(
            num_scalar_prefetch=0,
            grid=(1,),
            in_specs=[
                pl.BlockSpec((n_pad, n_pad), lambda i: (0, 0)),
                pl.BlockSpec((n_pad, f_pad), lambda i: (0, 0)),
                pl.BlockSpec((num_layers, f_pad, f_pad), lambda i: (0, 0, 0)),
            ],
            out_specs=pl.BlockSpec((n_pad, f_pad), lambda i: (0, 0)),
        ),
        compiler_params=pltpu.CompilerParams(
            dimension_semantics=("arbitrary",),
        ),
    )(a_pad, x_pad, w_pad)


# ------------------------------ JAX glue ------------------------------------
def build_norm_adj(edge_index, num_nodes):
    """Dense D^{-1/2}(A+I)D^{-1/2} from edge_index [2, E] (row=src, col=dst)."""
    src, dst = edge_index[0], edge_index[1]
    A = jnp.zeros((num_nodes, num_nodes), jnp.float32)
    A = A.at[dst, src].add(1.0)                     # messages flow src -> dst
    A = A + jnp.eye(num_nodes, dtype=jnp.float32)   # add self-loops
    deg = A.sum(axis=1)
    dinv = jnp.where(deg > 0, 1.0 / jnp.sqrt(deg), 0.0)
    return dinv[:, None] * A * dinv[None, :]


def glorot(key, fan_in, fan_out):
    limit = (6.0 / (fan_in + fan_out)) ** 0.5
    return jax.random.uniform(key, (fan_in, fan_out), jnp.float32, -limit, limit)


def init_gcn_params(key, num_layers, num_feats, dim_hidden, num_classes):
    dims = [num_feats] + [dim_hidden] * (num_layers - 1) + [num_classes]
    if num_layers == 1:
        dims = [num_feats, num_classes]
    keys = jax.random.split(key, num_layers)
    return [glorot(keys[i], dims[i], dims[i + 1]) for i in range(num_layers)]


def gcn_forward(x, edge_index, weights):
    """Eval-mode forward pass of the GCN module (type_norm='None')."""
    n, f_in = x.shape
    num_layers = len(weights)
    num_classes = weights[-1].shape[1]

    # Pad node and feature dims: lane-dense (multiple of 128) everywhere.
    dims = [w.shape[0] for w in weights] + [num_classes]
    f_pad = _round_up(max(dims + [f_in]), 128)
    n_pad = _round_up(n, 128)

    a_hat = build_norm_adj(edge_index, n)
    a_pad = jnp.zeros((n_pad, n_pad), jnp.bfloat16)
    a_pad = a_pad.at[:n, :n].set(a_hat.astype(jnp.bfloat16))

    x_pad = jnp.zeros((n_pad, f_pad), jnp.float32).at[:n, :f_in].set(x)

    w_pad = jnp.stack([
        jnp.zeros((f_pad, f_pad), jnp.float32)
           .at[:w.shape[0], :w.shape[1]].set(w)
        for w in weights
    ])

    out_pad = gcn_layers_fused(a_pad, x_pad, w_pad)
    return out_pad[:n, :num_classes]


# ------------------------------- main ---------------------------------------
if __name__ == "__main__":
    N = 64            # number of graph nodes
    NUM_FEATS = 32
    DIM_HIDDEN = 32
    NUM_CLASSES = 16
    NUM_LAYERS = 3
    NUM_EDGES = 256

    key = jax.random.PRNGKey(0)
    k_x, k_e, k_w, k_y = jax.random.split(key, 4)

    x = jax.random.normal(k_x, (N, NUM_FEATS), jnp.float32)
    # random directed edges, symmetrized (typical citation-graph preprocessing)
    e = jax.random.randint(k_e, (2, NUM_EDGES), 0, N, jnp.int32)
    edge_index = jnp.concatenate([e, e[::-1]], axis=1)            # [2, 2*E]
    y = jax.random.randint(k_y, (N,), 0, NUM_CLASSES, jnp.int32)  # unused in eval fwd

    weights = init_gcn_params(k_w, NUM_LAYERS, NUM_FEATS, DIM_HIDDEN, NUM_CLASSES)

    out = gcn_forward(x, edge_index, weights)
    out = jax.block_until_ready(out)
    assert out.shape == (N, NUM_CLASSES) and out.dtype == jnp.float32

    print("KERNEL_OK")
</pallas_src>

<mosaic_0001>
module attributes {stable_mosaic.version = 11 : i64} {
  func.func @_gcn_fused_kernel(%arg0: i32, %arg1: memref<128x128xbf16, #tpu.memory_space<vmem>>, %arg2: memref<128x128xf32, #tpu.memory_space<vmem>>, %arg3: memref<3x128x128xf32, #tpu.memory_space<vmem>>, %arg4: memref<128x128xf32, #tpu.memory_space<vmem>>) attributes {dimension_semantics = [#tpu.dimension_semantics<arbitrary>], iteration_bounds = array<i64: 1>, scalar_prefetch = 0 : i64, scratch_operands = 0 : i64, tpu.core_type = #tpu.core_type<tc>, window_params = [{pipeline_mode = #tpu.pipeline_mode<synchronous>, transform_indices = @transform_0, window_bounds = array<i64: 128, 128>}, {pipeline_mode = #tpu.pipeline_mode<synchronous>, transform_indices = @transform_1, window_bounds = array<i64: 128, 128>}, {pipeline_mode = #tpu.pipeline_mode<synchronous>, transform_indices = @transform_2, window_bounds = array<i64: 3, 128, 128>}, {pipeline_mode = #tpu.pipeline_mode<synchronous>, transform_indices = @transform_3, window_bounds = array<i64: 128, 128>}]} {
    %c0 = arith.constant 0 : index
    %c0_0 = arith.constant 0 : index
    %0 = vector.load %arg1[%c0, %c0_0] : memref<128x128xbf16, #tpu.memory_space<vmem>>, vector<128x128xbf16>
    %c0_1 = arith.constant 0 : index
    %c0_2 = arith.constant 0 : index
    %1 = vector.load %arg2[%c0_1, %c0_2] : memref<128x128xf32, #tpu.memory_space<vmem>>, vector<128x128xf32>
    %c0_3 = arith.constant 0 : index
    %c0_4 = arith.constant 0 : index
    %c0_5 = arith.constant 0 : index
    %2 = vector.load %arg3[%c0_3, %c0_4, %c0_5] : memref<3x128x128xf32, #tpu.memory_space<vmem>>, vector<1x128x128xf32>
    %3 = vector.shape_cast %2 : vector<1x128x128xf32> to vector<128x128xf32>
    %cst = arith.constant dense<0.000000e+00> : vector<128x128xf32>
    %4 = tpu.matmul %1, %3, %cst {dimension_numbers = #tpu.dot_dimension_numbers<[1], [0], [0], [1], [0, 0, 1, 1], [], []>} : vector<128x128xf32>, vector<128x128xf32>, vector<128x128xf32> -> vector<128x128xf32>
    %5 = arith.truncf %4 : vector<128x128xf32> to vector<128x128xbf16>
    %cst_6 = arith.constant dense<0.000000e+00> : vector<128x128xf32>
    %6 = tpu.matmul %0, %5, %cst_6 {dimension_numbers = #tpu.dot_dimension_numbers<[1], [0], [0], [1], [0, 0, 1, 1], [], []>} : vector<128x128xbf16>, vector<128x128xbf16>, vector<128x128xf32> -> vector<128x128xf32>
    %cst_7 = arith.constant 0.000000e+00 : f32
    %7 = vector.broadcast %cst_7 : f32 to vector<128x128xf32>
    %8 = arith.maximumf %6, %7 : vector<128x128xf32>
    %c1 = arith.constant 1 : index
    %c0_8 = arith.constant 0 : index
    %c0_9 = arith.constant 0 : index
    %9 = vector.load %arg3[%c1, %c0_8, %c0_9] : memref<3x128x128xf32, #tpu.memory_space<vmem>>, vector<1x128x128xf32>
    %10 = vector.shape_cast %9 : vector<1x128x128xf32> to vector<128x128xf32>
    %cst_10 = arith.constant dense<0.000000e+00> : vector<128x128xf32>
    %11 = tpu.matmul %8, %10, %cst_10 {dimension_numbers = #tpu.dot_dimension_numbers<[1], [0], [0], [1], [0, 0, 1, 1], [], []>} : vector<128x128xf32>, vector<128x128xf32>, vector<128x128xf32> -> vector<128x128xf32>
    %12 = arith.truncf %11 : vector<128x128xf32> to vector<128x128xbf16>
    %cst_11 = arith.constant dense<0.000000e+00> : vector<128x128xf32>
    %13 = tpu.matmul %0, %12, %cst_11 {dimension_numbers = #tpu.dot_dimension_numbers<[1], [0], [0], [1], [0, 0, 1, 1], [], []>} : vector<128x128xbf16>, vector<128x128xbf16>, vector<128x128xf32> -> vector<128x128xf32>
    %cst_12 = arith.constant 0.000000e+00 : f32
    %14 = vector.broadcast %cst_12 : f32 to vector<128x128xf32>
    %15 = arith.maximumf %13, %14 : vector<128x128xf32>
    %c2 = arith.constant 2 : index
    %c0_13 = arith.constant 0 : index
    %c0_14 = arith.constant 0 : index
    %16 = vector.load %arg3[%c2, %c0_13, %c0_14] : memref<3x128x128xf32, #tpu.memory_space<vmem>>, vector<1x128x128xf32>
    %17 = vector.shape_cast %16 : vector<1x128x128xf32> to vector<128x128xf32>
    %cst_15 = arith.constant dense<0.000000e+00> : vector<128x128xf32>
    %18 = tpu.matmul %15, %17, %cst_15 {dimension_numbers = #tpu.dot_dimension_numbers<[1], [0], [0], [1], [0, 0, 1, 1], [], []>} : vector<128x128xf32>, vector<128x128xf32>, vector<128x128xf32> -> vector<128x128xf32>
    %19 = arith.truncf %18 : vector<128x128xf32> to vector<128x128xbf16>
    %cst_16 = arith.constant dense<0.000000e+00> : vector<128x128xf32>
    %20 = tpu.matmul %0, %19, %cst_16 {dimension_numbers = #tpu.dot_dimension_numbers<[1], [0], [0], [1], [0, 0, 1, 1], [], []>} : vector<128x128xbf16>, vector<128x128xbf16>, vector<128x128xf32> -> vector<128x128xf32>
    %c0_17 = arith.constant 0 : index
    %c0_18 = arith.constant 0 : index
    %21 = vector.load %arg4[%c0_17, %c0_18] : memref<128x128xf32, #tpu.memory_space<vmem>>, vector<128x128xf32>
    tpu.vector_store %arg4[%c0_17, %c0_18], %20 {strides = array<i32>} : memref<128x128xf32, #tpu.memory_space<vmem>>, vector<128x128xf32>,
    return
  }
  func.func @transform_0(%arg0: i32) -> (i32, i32) {
    %c0_i32 = arith.constant 0 : i32
    %c0_i32_0 = arith.constant 0 : i32
    %c0_i32_1 = arith.constant 0 : i32
    return %c0_i32, %c0_i32_0 : i32, i32
  }
  func.func @transform_1(%arg0: i32) -> (i32, i32) {
    %c0_i32 = arith.constant 0 : i32
    %c0_i32_0 = arith.constant 0 : i32
    %c0_i32_1 = arith.constant 0 : i32
    return %c0_i32, %c0_i32_0 : i32, i32
  }
  func.func @transform_2(%arg0: i32) -> (i32, i32, i32) {
    %c0_i32 = arith.constant 0 : i32
    %c0_i32_0 = arith.constant 0 : i32
    %c0_i32_1 = arith.constant 0 : i32
    %c0_i32_2 = arith.constant 0 : i32
    return %c0_i32, %c0_i32_0, %c0_i32_1 : i32, i32, i32
  }
  func.func @transform_3(%arg0: i32) -> (i32, i32) {
    %c0_i32 = arith.constant 0 : i32
    %c0_i32_0 = arith.constant 0 : i32
    %c0_i32_1 = arith.constant 0 : i32
    return %c0_i32, %c0_i32_0 : i32, i32
  }
}

</mosaic_0001>

<llo_original>
// kernel: tpu_custom_call.1
$region0: #{tpu_custom_call.1}
  #allocation0 [shape = 'u32[]', space=smem, size = 0x4, offset = 0x4, fixed_abs, tag = 'smem constant byte address 0x4 - core index']
  #allocation1 [shape = 'u32[72,128]{1,0:T(1,128)}', space=vmem, size = 0x9000, scoped, tag = 'internal scratch']
  %s0 = inlined_call_operand.hbm [shape: bf16[128,128], index: 0, kind: input, shape index: {}]
  %s1 = inlined_call_operand.hbm [shape: f32[128,128], index: 1, kind: input, shape index: {}]
  %s2 = inlined_call_operand.hbm [shape: f32[3,128,128], index: 2, kind: input, shape index: {}]
  %s3 = inlined_call_operand.hbm [shape: f32[128,128], index: 3, kind: output, shape index: {}]
  %s4 = sld [smem:[#allocation0]]
  $region34: #{tpu_custom_call.1} parent=0
    _
  %s6 = ssub.s32 1, %s4
  %s7 = scalar_select 0, %s6, %s4
  $region1: #{tpu_custom_call.1} parent=0
    #allocation2 [shape = 'u8[32768]{0}', space=vmem, size = 0x8000, scoped, tag = 'input window, operand 0, single buffered']
    #allocation3 [shape = 's32[1]{0}', space=sflag, size = 0x4, scoped, tag = 'scoped memory for tpu_custom_call.1']
    #allocation4 [shape = 's32[1]{0}', space=sflag, size = 0x4, scoped, tag = 'scoped memory for tpu_custom_call.1']
    #allocation5 [shape = 'u8[65536]{0}', space=vmem, size = 0x10000, scoped, tag = 'input window, operand 1, single buffered']
    #allocation6 [shape = 's32[1]{0}', space=sflag, size = 0x4, scoped, tag = 'scoped memory for tpu_custom_call.1']
    #allocation7 [shape = 'u8[196608]{0}', space=vmem, size = 0x30000, scoped, tag = 'input window, operand 2, single buffered']
    #allocation8 [shape = 'u8[65536]{0}', space=vmem, size = 0x10000, scoped, tag = 'output window, operand 0, single buffered']
    %8 = vsyncpa [#allocation3], 0
    %9 = vsyncpa [#allocation6], 0
    %10 = vsyncpa [#allocation4], 0
    // Predicated region
    $region2: #{tpu_custom_call.1} parent=1 // pred_check
      _
    $region3: #{tpu_custom_call.1} parent=1 // pred_check_branch
      %12 = sbr.rel (0) target = $region5
    $region4: #{tpu_custom_call.1} parent=1 // pred_region
      %14 = vsyncadd [#allocation3], 0
      %s15 = sshll.u32 %s0, 4
      %s16 = int_to_ptr.hbm [resolvable:$true] %s15
      %s17 = sshll.u32 [#allocation2], 4
      %s18 = int_to_ptr.vmem [resolvable:$true] %s17
      %23 = dma.hbm_to_vmem [thread:$0]  %s16, 1024, %s18, [#allocation3], 64, 64, 4
    $region5: #{tpu_custom_call.1} parent=1 // pred_fallthru
      _
    // Predicated region
    $region6: #{tpu_custom_call.1} parent=1 // pred_check
      _
    $region7: #{tpu_custom_call.1} parent=1 // pred_check_branch
      %25 = sbr.rel (0) target = $region9
    $region8: #{tpu_custom_call.1} parent=1 // pred_region
      %27 = vsyncadd [#allocation6], 0
      %s28 = sshll.u32 %s1, 4
      %s29 = int_to_ptr.hbm [resolvable:$true] %s28
      %s30 = sshll.u32 [#allocation5], 4
      %s31 = int_to_ptr.vmem [resolvable:$true] %s30
      %36 = dma.hbm_to_vmem [thread:$0]  %s29, 2048, %s31, [#allocation6], 128, 128, 8
    $region9: #{tpu_custom_call.1} parent=1 // pred_fallthru
      _
    // Predicated region
    $region10: #{tpu_custom_call.1} parent=1 // pred_check
      _
    $region11: #{tpu_custom_call.1} parent=1 // pred_check_branch
      %38 = sbr.rel (0) target = $region13
    $region12: #{tpu_custom_call.1} parent=1 // pred_region
      %40 = vsyncadd [#allocation6], 0
      %s41 = sshll.u32 %s2, 4
      %s42 = int_to_ptr.hbm [resolvable:$true] %s41
      %s43 = sshll.u32 [#allocation7], 4
      %s44 = int_to_ptr.vmem [resolvable:$true] %s43
      %49 = dma.hbm_to_vmem [thread:$0]  %s42, 6144, %s44, [#allocation6], 128, 128, 8
    $region13: #{tpu_custom_call.1} parent=1 // pred_fallthru
      _
    // Predicated region
    $region14: #{tpu_custom_call.1} parent=1 // pred_check
      _
    $region15: #{tpu_custom_call.1} parent=1 // pred_check_branch
      %51 = sbr.rel (0) target = $region17
    $region16: #{tpu_custom_call.1} parent=1 // pred_region
      %53 = dma.done [#allocation3], 1024
    $region17: #{tpu_custom_call.1} parent=1 // pred_fallthru
      _
    // Predicated region
    $region18: #{tpu_custom_call.1} parent=1 // pred_check
      _
    $region19: #{tpu_custom_call.1} parent=1 // pred_check_branch
      %55 = sbr.rel (0) target = $region21
    $region20: #{tpu_custom_call.1} parent=1 // pred_region
      %57 = dma.done [#allocation6], 2048
    $region21: #{tpu_custom_call.1} parent=1 // pred_fallthru
      _
    // Predicated region
    $region22: #{tpu_custom_call.1} parent=1 // pred_check
      _
    $region23: #{tpu_custom_call.1} parent=1 // pred_check_branch
      %59 = sbr.rel (0) target = $region25
    $region24: #{tpu_custom_call.1} parent=1 // pred_region
      %61 = dma.done [#allocation6], 6144
    $region25: #{tpu_custom_call.1} parent=1 // pred_fallthru
      _
    %v62 = vld [vmem:[#allocation2] sm:$0xf]
    %v63 = vld [vmem:[#allocation2 + $0x4] sm:$0xf]
    %v64 = vld [vmem:[#allocation2 + $0x8] sm:$0xf]
    %v65 = vld [vmem:[#allocation2 + $0xc] sm:$0xf]
    %v66 = vld [vmem:[#allocation2 + $0x10] sm:$0xf]
    %v67 = vld [vmem:[#allocation2 + $0x14] sm:$0xf]
    %v68 = vld [vmem:[#allocation2 + $0x18] sm:$0xf]
    %v69 = vld [vmem:[#allocation2 + $0x1c] sm:$0xf]
    %v70 = vld [vmem:[#allocation2 + $0x20] sm:$0xf]
    %v71 = vld [vmem:[#allocation2 + $0x24] sm:$0xf]
    %v72 = vld [vmem:[#allocation2 + $0x28] sm:$0xf]
    %v73 = vld [vmem:[#allocation2 + $0x2c] sm:$0xf]
    %v74 = vld [vmem:[#allocation2 + $0x30] sm:$0xf]
    %v75 = vld [vmem:[#allocation2 + $0x34] sm:$0xf]
    %v76 = vld [vmem:[#allocation2 + $0x38] sm:$0xf]
    %v77 = vld [vmem:[#allocation2 + $0x3c] sm:$0xf]
    %v78 = vld [vmem:[#allocation5] sm:$0xff]
    %v79 = vld [vmem:[#allocation5 + $0x8] sm:$0xff]
    %v80 = vld [vmem:[#allocation5 + $0x10] sm:$0xff]
    %v81 = vld [vmem:[#allocation5 + $0x18] sm:$0xff]
    %v82 = vld [vmem:[#allocation5 + $0x20] sm:$0xff]
    %v83 = vld [vmem:[#allocation5 + $0x28] sm:$0xff]
    %v84 = vld [vmem:[#allocation5 + $0x30] sm:$0xff]
    %v85 = vld [vmem:[#allocation5 + $0x38] sm:$0xff]
    %v86 = vld [vmem:[#allocation5 + $0x40] sm:$0xff]
    %v87 = vld [vmem:[#allocation5 + $0x48] sm:$0xff]
    %v88 = vld [vmem:[#allocation5 + $0x50] sm:$0xff]
    %v89 = vld [vmem:[#allocation5 + $0x58] sm:$0xff]
    %v90 = vld [vmem:[#allocation5 + $0x60] sm:$0xff]
    %v91 = vld [vmem:[#allocation5 + $0x68] sm:$0xff]
    %v92 = vld [vmem:[#allocation5 + $0x70] sm:$0xff]
    %v93 = vld [vmem:[#allocation5 + $0x78] sm:$0xff]
    %v94 = vld [vmem:[#allocation7] sm:$0xff]
    %v95 = vld [vmem:[#allocation7 + $0x8] sm:$0xff]
    %v96 = vld [vmem:[#allocation7 + $0x10] sm:$0xff]
    %v97 = vld [vmem:[#allocation7 + $0x18] sm:$0xff]
    %v98 = vld [vmem:[#allocation7 + $0x20] sm:$0xff]
    %v99 = vld [vmem:[#allocation7 + $0x28] sm:$0xff]
    %v100 = vld [vmem:[#allocation7 + $0x30] sm:$0xff]
    %v101 = vld [vmem:[#allocation7 + $0x38] sm:$0xff]
    %v102 = vld [vmem:[#allocation7 + $0x40] sm:$0xff]
    %v103 = vld [vmem:[#allocation7 + $0x48] sm:$0xff]
    %v104 = vld [vmem:[#allocation7 + $0x50] sm:$0xff]
    %v105 = vld [vmem:[#allocation7 + $0x58] sm:$0xff]
    %v106 = vld [vmem:[#allocation7 + $0x60] sm:$0xff]
    %v107 = vld [vmem:[#allocation7 + $0x68] sm:$0xff]
    %v108 = vld [vmem:[#allocation7 + $0x70] sm:$0xff]
    %v109 = vld [vmem:[#allocation7 + $0x78] sm:$0xff]
    %110 = vmatpush.msra.mxu0 %v109
    %111 = vmatpush.msra.mxu0 %v108
    %112 = vmatpush.msra.mxu0 %v107
    %113 = vmatpush.msra.mxu0 %v106
    %114 = vmatpush.msra.mxu0 %v105
    %115 = vmatpush.msra.mxu0 %v104
    %116 = vmatpush.msra.mxu0 %v103
    %117 = vmatpush.msra.mxu0 %v102
    %118 = vmatpush.msra.mxu0 %v101
    %119 = vmatpush.msra.mxu0 %v100
    %120 = vmatpush.msra.mxu0 %v99
    %121 = vmatpush.msra.mxu0 %v98
    %122 = vmatpush.msra.mxu0 %v97
    %123 = vmatpush.msra.mxu0 %v96
    %124 = vmatpush.msra.mxu0 %v95
    %125 = vmatpush.msra.mxu0 %v94
    %126 = vmatmul.f32.gmra.mxu0 %v78
    %v127 = vpop.f32.mrf.mxu0
    %v128 = vadd.f32 0.0, %v127
    %129 = vmatmul.f32.gmra.mxu0 %v79
    %v130 = vpop.f32.mrf.mxu0
    %v131 = vadd.f32 0.0, %v130
    %132 = vmatmul.f32.gmra.mxu0 %v80
    %v133 = vpop.f32.mrf.mxu0
    %v134 = vadd.f32 0.0, %v133
    %135 = vmatmul.f32.gmra.mxu0 %v81
    %v136 = vpop.f32.mrf.mxu0
    %v137 = vadd.f32 0.0, %v136
    %138 = vmatmul.f32.gmra.mxu0 %v82
    %v139 = vpop.f32.mrf.mxu0
    %v140 = vadd.f32 0.0, %v139
    %141 = vmatmul.f32.gmra.mxu0 %v83
    %v142 = vpop.f32.mrf.mxu0
    %v143 = vadd.f32 0.0, %v142
    %144 = vmatmul.f32.gmra.mxu0 %v84
    %v145 = vpop.f32.mrf.mxu0
    %v146 = vadd.f32 0.0, %v145
    %147 = vmatmul.f32.gmra.mxu0 %v85
    %v148 = vpop.f32.mrf.mxu0
    %v149 = vadd.f32 0.0, %v148
    %150 = vmatmul.f32.gmra.mxu0 %v86
    %v151 = vpop.f32.mrf.mxu0
    %v152 = vadd.f32 0.0, %v151
    %153 = vmatmul.f32.gmra.mxu0 %v87
    %v154 = vpop.f32.mrf.mxu0
    %v155 = vadd.f32 0.0, %v154
    %156 = vmatmul.f32.gmra.mxu0 %v88
    %v157 = vpop.f32.mrf.mxu0
    %v158 = vadd.f32 0.0, %v157
    %159 = vmatmul.f32.gmra.mxu0 %v89
    %v160 = vpop.f32.mrf.mxu0
    %v161 = vadd.f32 0.0, %v160
    %162 = vmatmul.f32.gmra.mxu0 %v90
    %v163 = vpop.f32.mrf.mxu0
    %v164 = vadd.f32 0.0, %v163
    %165 = vmatmul.f32.gmra.mxu0 %v91
    %v166 = vpop.f32.mrf.mxu0
    %v167 = vadd.f32 0.0, %v166
    %168 = vmatmul.f32.gmra.mxu0 %v92
    %v169 = vpop.f32.mrf.mxu0
    %v170 = vadd.f32 0.0, %v169
    %171 = vmatmul.f32.gmra.mxu0 %v93
    %v172 = vpop.f32.mrf.mxu0
    %v173 = vadd.f32 0.0, %v172
    %174 = vdwg.mxu0
    %v175 = vpack.c.bf16 %v131, %v128
    %v176 = vpack.c.bf16 %v137, %v134
    %v177 = vpack.c.bf16 %v143, %v140
    %v178 = vpack.c.bf16 %v149, %v146
    %v179 = vpack.c.bf16 %v155, %v152
    %v180 = vpack.c.bf16 %v161, %v158
    %v181 = vpack.c.bf16 %v167, %v164
    %v182 = vpack.c.bf16 %v173, %v170
    %v199 = vunpack.c.l.b16 %v62
    %v200 = vunpack.c.l.b16 %v63
    %v201 = vunpack.c.l.b16 %v64
    %v202 = vunpack.c.l.b16 %v65
    %v203 = vunpack.c.l.b16 %v66
    %v204 = vunpack.c.l.b16 %v67
    %v205 = vunpack.c.l.b16 %v68
    %v206 = vunpack.c.l.b16 %v69
    %v207 = vunpack.c.l.b16 %v70
    %v208 = vunpack.c.l.b16 %v71
    %v209 = vunpack.c.l.b16 %v72
    %v210 = vunpack.c.l.b16 %v73
    %v211 = vunpack.c.l.b16 %v74
    %v212 = vunpack.c.l.b16 %v75
    %v213 = vunpack.c.l.b16 %v76
    %v214 = vunpack.c.l.b16 %v77
    %v215 = vpack.c.b16 %v200, %v199
    %v216 = vpack.c.b16 %v202, %v201
    %v217 = vpack.c.b16 %v204, %v203
    %v218 = vpack.c.b16 %v206, %v205
    %v219 = vpack.c.b16 %v208, %v207
    %v220 = vpack.c.b16 %v210, %v209
    %v221 = vpack.c.b16 %v212, %v211
    %v222 = vpack.c.b16 %v214, %v213
    %231 = vmatpush.bf16.msra.mxu0 %v182
    %232 = vmatpush.bf16.msra.mxu0 %v181
    %233 = vmatpush.bf16.msra.mxu0 %v180
    %234 = vmatpush.bf16.msra.mxu0 %v179
    %235 = vmatpush.bf16.msra.mxu0 %v178
    %236 = vmatpush.bf16.msra.mxu0 %v177
    %237 = vmatpush.bf16.msra.mxu0 %v176
    %238 = vmatpush.bf16.msra.mxu0 %v175
    %239 = vmatmul.bf16.gmra.mxu0 %v215
    %v240 = vpop.f32.mrf.mxu0
    %v241 = vadd.f32 0.0, %v240
    %v242 = vpop.f32.mrf.mxu0
    %v243 = vadd.f32 0.0, %v242
    %244 = vmatmul.bf16.gmra.mxu0 %v216
    %v245 = vpop.f32.mrf.mxu0
    %v246 = vadd.f32 0.0, %v245
    %v247 = vpop.f32.mrf.mxu0
    %v248 = vadd.f32 0.0, %v247
    %249 = vmatmul.bf16.gmra.mxu0 %v217
    %v250 = vpop.f32.mrf.mxu0
    %v251 = vadd.f32 0.0, %v250
    %v252 = vpop.f32.mrf.mxu0
    %v253 = vadd.f32 0.0, %v252
    %254 = vmatmul.bf16.gmra.mxu0 %v218
    %v255 = vpop.f32.mrf.mxu0
    %v256 = vadd.f32 0.0, %v255
    %v257 = vpop.f32.mrf.mxu0
    %v258 = vadd.f32 0.0, %v257
    %259 = vmatmul.bf16.gmra.mxu0 %v219
    %v260 = vpop.f32.mrf.mxu0
    %v261 = vadd.f32 0.0, %v260
    %v262 = vpop.f32.mrf.mxu0
    %v263 = vadd.f32 0.0, %v262
    %264 = vmatmul.bf16.gmra.mxu0 %v220
    %v265 = vpop.f32.mrf.mxu0
    %v266 = vadd.f32 0.0, %v265
    %v267 = vpop.f32.mrf.mxu0
    %v268 = vadd.f32 0.0, %v267
    %269 = vmatmul.bf16.gmra.mxu0 %v221
    %v270 = vpop.f32.mrf.mxu0
    %v271 = vadd.f32 0.0, %v270
    %v272 = vpop.f32.mrf.mxu0
    %v273 = vadd.f32 0.0, %v272
    %274 = vmatmul.bf16.gmra.mxu0 %v222
    %v275 = vpop.f32.mrf.mxu0
    %v276 = vadd.f32 0.0, %v275
    %v277 = vpop.f32.mrf.mxu0
    %v278 = vadd.f32 0.0, %v277
    %279 = vdwg.mxu0
    %v280 = vmax.f32 %v241, 0.0
    %v281 = vmax.f32 %v243, 0.0
    %v282 = vmax.f32 %v246, 0.0
    %v283 = vmax.f32 %v248, 0.0
    %v284 = vmax.f32 %v251, 0.0
    %v285 = vmax.f32 %v253, 0.0
    %v286 = vmax.f32 %v256, 0.0
    %v287 = vmax.f32 %v258, 0.0
    %v288 = vmax.f32 %v261, 0.0
    %v289 = vmax.f32 %v263, 0.0
    %v290 = vmax.f32 %v266, 0.0
    %v291 = vmax.f32 %v268, 0.0
    %v292 = vmax.f32 %v271, 0.0
    %v293 = vmax.f32 %v273, 0.0
    %v294 = vmax.f32 %v276, 0.0
    %v295 = vmax.f32 %v278, 0.0
    %s296 = scalar_lea.vmem [#allocation7], 128
    %v297 = vld [vmem:[%s296] sm:$0xff]
    %v298 = vld [vmem:[%s296 + $0x8] sm:$0xff]
    %v299 = vld [vmem:[%s296 + $0x10] sm:$0xff]
    %v300 = vld [vmem:[%s296 + $0x18] sm:$0xff]
    %v301 = vld [vmem:[%s296 + $0x20] sm:$0xff]
    %v302 = vld [vmem:[%s296 + $0x28] sm:$0xff]
    %v303 = vld [vmem:[%s296 + $0x30] sm:$0xff]
    %v304 = vld [vmem:[%s296 + $0x38] sm:$0xff]
    %v305 = vld [vmem:[%s296 + $0x40] sm:$0xff]
    %v306 = vld [vmem:[%s296 + $0x48] sm:$0xff]
    %v307 = vld [vmem:[%s296 + $0x50] sm:$0xff]
    %v308 = vld [vmem:[%s296 + $0x58] sm:$0xff]
    %v309 = vld [vmem:[%s296 + $0x60] sm:$0xff]
    %v310 = vld [vmem:[%s296 + $0x68] sm:$0xff]
    %v311 = vld [vmem:[%s296 + $0x70] sm:$0xff]
    %v312 = vld [vmem:[%s296 + $0x78] sm:$0xff]
    %313 = vmatpush.msra.mxu0 %v312
    %314 = vmatpush.msra.mxu0 %v311
    %315 = vmatpush.msra.mxu0 %v310
    %316 = vmatpush.msra.mxu0 %v309
    %317 = vmatpush.msra.mxu0 %v308
    %318 = vmatpush.msra.mxu0 %v307
    %319 = vmatpush.msra.mxu0 %v306
    %320 = vmatpush.msra.mxu0 %v305
    %321 = vmatpush.msra.mxu0 %v304
    %322 = vmatpush.msra.mxu0 %v303
    %323 = vmatpush.msra.mxu0 %v302
    %324 = vmatpush.msra.mxu0 %v301
    %325 = vmatpush.msra.mxu0 %v300
    %326 = vmatpush.msra.mxu0 %v299
    %327 = vmatpush.msra.mxu0 %v298
    %328 = vmatpush.msra.mxu0 %v297
    %329 = vmatmul.f32.gmra.mxu0 %v280
    %v330 = vpop.f32.mrf.mxu0
    %v331 = vadd.f32 0.0, %v330
    %332 = vmatmul.f32.gmra.mxu0 %v281
    %v333 = vpop.f32.mrf.mxu0
    %v334 = vadd.f32 0.0, %v333
    %335 = vmatmul.f32.gmra.mxu0 %v282
    %v336 = vpop.f32.mrf.mxu0
    %v337 = vadd.f32 0.0, %v336
    %338 = vmatmul.f32.gmra.mxu0 %v283
    %v339 = vpop.f32.mrf.mxu0
    %v340 = vadd.f32 0.0, %v339
    %341 = vmatmul.f32.gmra.mxu0 %v284
    %v342 = vpop.f32.mrf.mxu0
    %v343 = vadd.f32 0.0, %v342
    %344 = vmatmul.f32.gmra.mxu0 %v285
    %v345 = vpop.f32.mrf.mxu0
    %v346 = vadd.f32 0.0, %v345
    %347 = vmatmul.f32.gmra.mxu0 %v286
    %v348 = vpop.f32.mrf.mxu0
    %v349 = vadd.f32 0.0, %v348
    %350 = vmatmul.f32.gmra.mxu0 %v287
    %v351 = vpop.f32.mrf.mxu0
    %v352 = vadd.f32 0.0, %v351
    %353 = vmatmul.f32.gmra.mxu0 %v288
    %v354 = vpop.f32.mrf.mxu0
    %v355 = vadd.f32 0.0, %v354
    %356 = vmatmul.f32.gmra.mxu0 %v289
    %v357 = vpop.f32.mrf.mxu0
    %v358 = vadd.f32 0.0, %v357
    %359 = vmatmul.f32.gmra.mxu0 %v290
    %v360 = vpop.f32.mrf.mxu0
    %v361 = vadd.f32 0.0, %v360
    %362 = vmatmul.f32.gmra.mxu0 %v291
    %v363 = vpop.f32.mrf.mxu0
    %v364 = vadd.f32 0.0, %v363
    %365 = vmatmul.f32.gmra.mxu0 %v292
    %v366 = vpop.f32.mrf.mxu0
    %v367 = vadd.f32 0.0, %v366
    %368 = vmatmul.f32.gmra.mxu0 %v293
    %v369 = vpop.f32.mrf.mxu0
    %v370 = vadd.f32 0.0, %v369
    %371 = vmatmul.f32.gmra.mxu0 %v294
    %v372 = vpop.f32.mrf.mxu0
    %v373 = vadd.f32 0.0, %v372
    %374 = vmatmul.f32.gmra.mxu0 %v295
    %v375 = vpop.f32.mrf.mxu0
    %v376 = vadd.f32 0.0, %v375
    %377 = vdwg.mxu0
    %v378 = vpack.c.bf16 %v334, %v331
    %v379 = vpack.c.bf16 %v340, %v337
    %v380 = vpack.c.bf16 %v346, %v343
    %v381 = vpack.c.bf16 %v352, %v349
    %v382 = vpack.c.bf16 %v358, %v355
    %v383 = vpack.c.bf16 %v364, %v361
    %v384 = vpack.c.bf16 %v370, %v367
    %v385 = vpack.c.bf16 %v376, %v373
    %386 = vmatpush.bf16.msra.mxu0 %v385
    %387 = vmatpush.bf16.msra.mxu0 %v384
    %388 = vmatpush.bf16.msra.mxu0 %v383
    %389 = vmatpush.bf16.msra.mxu0 %v382
    %390 = vmatpush.bf16.msra.mxu0 %v381
    %391 = vmatpush.bf16.msra.mxu0 %v380
    %392 = vmatpush.bf16.msra.mxu0 %v379
    %393 = vmatpush.bf16.msra.mxu0 %v378
    %394 = vmatmul.bf16.gmra.mxu0 %v215
    %v395 = vpop.f32.mrf.mxu0
    %v396 = vadd.f32 0.0, %v395
    %v397 = vpop.f32.mrf.mxu0
    %v398 = vadd.f32 0.0, %v397
    %399 = vmatmul.bf16.gmra.mxu0 %v216
    %v400 = vpop.f32.mrf.mxu0
    %v401 = vadd.f32 0.0, %v400
    %v402 = vpop.f32.mrf.mxu0
    %v403 = vadd.f32 0.0, %v402
    %404 = vmatmul.bf16.gmra.mxu0 %v217
    %v405 = vpop.f32.mrf.mxu0
    %v406 = vadd.f32 0.0, %v405
    %v407 = vpop.f32.mrf.mxu0
    %v408 = vadd.f32 0.0, %v407
    %409 = vmatmul.bf16.gmra.mxu0 %v218
    %v410 = vpop.f32.mrf.mxu0
    %v411 = vadd.f32 0.0, %v410
    %v412 = vpop.f32.mrf.mxu0
    %v413 = vadd.f32 0.0, %v412
    %414 = vmatmul.bf16.gmra.mxu0 %v219
    %v415 = vpop.f32.mrf.mxu0
    %v416 = vadd.f32 0.0, %v415
    %v417 = vpop.f32.mrf.mxu0
    %v418 = vadd.f32 0.0, %v417
    %419 = vmatmul.bf16.gmra.mxu0 %v220
    %v420 = vpop.f32.mrf.mxu0
    %v421 = vadd.f32 0.0, %v420
    %v422 = vpop.f32.mrf.mxu0
    %v423 = vadd.f32 0.0, %v422
    %424 = vmatmul.bf16.gmra.mxu0 %v221
    %v425 = vpop.f32.mrf.mxu0
    %v426 = vadd.f32 0.0, %v425
    %v427 = vpop.f32.mrf.mxu0
    %v428 = vadd.f32 0.0, %v427
    %429 = vmatmul.bf16.gmra.mxu0 %v222
    %v430 = vpop.f32.mrf.mxu0
    %v431 = vadd.f32 0.0, %v430
    %v432 = vpop.f32.mrf.mxu0
    %v433 = vadd.f32 0.0, %v432
    %434 = vdwg.mxu0
    %v435 = vmax.f32 %v396, 0.0
    %v436 = vmax.f32 %v398, 0.0
    %v437 = vmax.f32 %v401, 0.0
    %v438 = vmax.f32 %v403, 0.0
    %v439 = vmax.f32 %v406, 0.0
    %v440 = vmax.f32 %v408, 0.0
    %v441 = vmax.f32 %v411, 0.0
    %v442 = vmax.f32 %v413, 0.0
    %v443 = vmax.f32 %v416, 0.0
    %v444 = vmax.f32 %v418, 0.0
    %v445 = vmax.f32 %v421, 0.0
    %v446 = vmax.f32 %v423, 0.0
    %v447 = vmax.f32 %v426, 0.0
    %v448 = vmax.f32 %v428, 0.0
    %v449 = vmax.f32 %v431, 0.0
    %v450 = vmax.f32 %v433, 0.0
    %s451 = scalar_lea.vmem [#allocation7], 256
    %v452 = vld [vmem:[%s451] sm:$0xff]
    %v453 = vld [vmem:[%s451 + $0x8] sm:$0xff]
    %v454 = vld [vmem:[%s451 + $0x10] sm:$0xff]
    %v455 = vld [vmem:[%s451 + $0x18] sm:$0xff]
    %v456 = vld [vmem:[%s451 + $0x20] sm:$0xff]
    %v457 = vld [vmem:[%s451 + $0x28] sm:$0xff]
    %v458 = vld [vmem:[%s451 + $0x30] sm:$0xff]
    %v459 = vld [vmem:[%s451 + $0x38] sm:$0xff]
    %v460 = vld [vmem:[%s451 + $0x40] sm:$0xff]
    %v461 = vld [vmem:[%s451 + $0x48] sm:$0xff]
    %v462 = vld [vmem:[%s451 + $0x50] sm:$0xff]
    %v463 = vld [vmem:[%s451 + $0x58] sm:$0xff]
    %v464 = vld [vmem:[%s451 + $0x60] sm:$0xff]
    %v465 = vld [vmem:[%s451 + $0x68] sm:$0xff]
    %v466 = vld [vmem:[%s451 + $0x70] sm:$0xff]
    %v467 = vld [vmem:[%s451 + $0x78] sm:$0xff]
    %468 = vmatpush.msra.mxu0 %v467
    %469 = vmatpush.msra.mxu0 %v466
    %470 = vmatpush.msra.mxu0 %v465
    %471 = vmatpush.msra.mxu0 %v464
    %472 = vmatpush.msra.mxu0 %v463
    %473 = vmatpush.msra.mxu0 %v462
    %474 = vmatpush.msra.mxu0 %v461
    %475 = vmatpush.msra.mxu0 %v460
    %476 = vmatpush.msra.mxu0 %v459
    %477 = vmatpush.msra.mxu0 %v458
    %478 = vmatpush.msra.mxu0 %v457
    %479 = vmatpush.msra.mxu0 %v456
    %480 = vmatpush.msra.mxu0 %v455
    %481 = vmatpush.msra.mxu0 %v454
    %482 = vmatpush.msra.mxu0 %v453
    %483 = vmatpush.msra.mxu0 %v452
    %484 = vmatmul.f32.gmra.mxu0 %v435
    %v485 = vpop.f32.mrf.mxu0
    %v486 = vadd.f32 0.0, %v485
    %487 = vmatmul.f32.gmra.mxu0 %v436
    %v488 = vpop.f32.mrf.mxu0
    %v489 = vadd.f32 0.0, %v488
    %490 = vmatmul.f32.gmra.mxu0 %v437
    %v491 = vpop.f32.mrf.mxu0
    %v492 = vadd.f32 0.0, %v491
    %493 = vmatmul.f32.gmra.mxu0 %v438
    %v494 = vpop.f32.mrf.mxu0
    %v495 = vadd.f32 0.0, %v494
    %496 = vmatmul.f32.gmra.mxu0 %v439
    %v497 = vpop.f32.mrf.mxu0
    %v498 = vadd.f32 0.0, %v497
    %499 = vmatmul.f32.gmra.mxu0 %v440
    %v500 = vpop.f32.mrf.mxu0
    %v501 = vadd.f32 0.0, %v500
    %502 = vmatmul.f32.gmra.mxu0 %v441
    %v503 = vpop.f32.mrf.mxu0
    %v504 = vadd.f32 0.0, %v503
    %505 = vmatmul.f32.gmra.mxu0 %v442
    %v506 = vpop.f32.mrf.mxu0
    %v507 = vadd.f32 0.0, %v506
    %508 = vmatmul.f32.gmra.mxu0 %v443
    %v509 = vpop.f32.mrf.mxu0
    %v510 = vadd.f32 0.0, %v509
    %511 = vmatmul.f32.gmra.mxu0 %v444
    %v512 = vpop.f32.mrf.mxu0
    %v513 = vadd.f32 0.0, %v512
    %514 = vmatmul.f32.gmra.mxu0 %v445
    %v515 = vpop.f32.mrf.mxu0
    %v516 = vadd.f32 0.0, %v515
    %517 = vmatmul.f32.gmra.mxu0 %v446
    %v518 = vpop.f32.mrf.mxu0
    %v519 = vadd.f32 0.0, %v518
    %520 = vmatmul.f32.gmra.mxu0 %v447
    %v521 = vpop.f32.mrf.mxu0
    %v522 = vadd.f32 0.0, %v521
    %523 = vmatmul.f32.gmra.mxu0 %v448
    %v524 = vpop.f32.mrf.mxu0
    %v525 = vadd.f32 0.0, %v524
    %526 = vmatmul.f32.gmra.mxu0 %v449
    %v527 = vpop.f32.mrf.mxu0
    %v528 = vadd.f32 0.0, %v527
    %529 = vmatmul.f32.gmra.mxu0 %v450
    %v530 = vpop.f32.mrf.mxu0
    %v531 = vadd.f32 0.0, %v530
    %532 = vdwg.mxu0
    %v533 = vpack.c.bf16 %v489, %v486
    %v534 = vpack.c.bf16 %v495, %v492
    %v535 = vpack.c.bf16 %v501, %v498
    %v536 = vpack.c.bf16 %v507, %v504
    %v537 = vpack.c.bf16 %v513, %v510
    %v538 = vpack.c.bf16 %v519, %v516
    %v539 = vpack.c.bf16 %v525, %v522
    %v540 = vpack.c.bf16 %v531, %v528
    %541 = vmatpush.bf16.msra.mxu0 %v540
    %542 = vmatpush.bf16.msra.mxu0 %v539
    %543 = vmatpush.bf16.msra.mxu0 %v538
    %544 = vmatpush.bf16.msra.mxu0 %v537
    %545 = vmatpush.bf16.msra.mxu0 %v536
    %546 = vmatpush.bf16.msra.mxu0 %v535
    %547 = vmatpush.bf16.msra.mxu0 %v534
    %548 = vmatpush.bf16.msra.mxu0 %v533
    %549 = vmatmul.bf16.gmra.mxu0 %v215
    %v550 = vpop.f32.mrf.mxu0
    %v551 = vadd.f32 0.0, %v550
    %v552 = vpop.f32.mrf.mxu0
    %v553 = vadd.f32 0.0, %v552
    %554 = vmatmul.bf16.gmra.mxu0 %v216
    %v555 = vpop.f32.mrf.mxu0
    %v556 = vadd.f32 0.0, %v555
    %v557 = vpop.f32.mrf.mxu0
    %v558 = vadd.f32 0.0, %v557
    %559 = vmatmul.bf16.gmra.mxu0 %v217
    %v560 = vpop.f32.mrf.mxu0
    %v561 = vadd.f32 0.0, %v560
    %v562 = vpop.f32.mrf.mxu0
    %v563 = vadd.f32 0.0, %v562
    %564 = vmatmul.bf16.gmra.mxu0 %v218
    %v565 = vpop.f32.mrf.mxu0
    %v566 = vadd.f32 0.0, %v565
    %v567 = vpop.f32.mrf.mxu0
    %v568 = vadd.f32 0.0, %v567
    %569 = vmatmul.bf16.gmra.mxu0 %v219
    %v570 = vpop.f32.mrf.mxu0
    %v571 = vadd.f32 0.0, %v570
    %v572 = vpop.f32.mrf.mxu0
    %v573 = vadd.f32 0.0, %v572
    %574 = vmatmul.bf16.gmra.mxu0 %v220
    %v575 = vpop.f32.mrf.mxu0
    %v576 = vadd.f32 0.0, %v575
    %v577 = vpop.f32.mrf.mxu0
    %v578 = vadd.f32 0.0, %v577
    %579 = vmatmul.bf16.gmra.mxu0 %v221
    %v580 = vpop.f32.mrf.mxu0
    %v581 = vadd.f32 0.0, %v580
    %v582 = vpop.f32.mrf.mxu0
    %v583 = vadd.f32 0.0, %v582
    %584 = vmatmul.bf16.gmra.mxu0 %v222
    %v585 = vpop.f32.mrf.mxu0
    %v586 = vadd.f32 0.0, %v585
    %v587 = vpop.f32.mrf.mxu0
    %v588 = vadd.f32 0.0, %v587
    %589 = vdwg.mxu0
    %590 = vst [vmem:[#allocation8] sm:$0xff] %v551
    %591 = vst [vmem:[#allocation8 + $0x8] sm:$0xff] %v553
    %592 = vst [vmem:[#allocation8 + $0x10] sm:$0xff] %v556
    %593 = vst [vmem:[#allocation8 + $0x18] sm:$0xff] %v558
    %594 = vst [vmem:[#allocation8 + $0x20] sm:$0xff] %v561
    %595 = vst [vmem:[#allocation8 + $0x28] sm:$0xff] %v563
    %596 = vst [vmem:[#allocation8 + $0x30] sm:$0xff] %v566
    %597 = vst [vmem:[#allocation8 + $0x38] sm:$0xff] %v568
    %598 = vst [vmem:[#allocation8 + $0x40] sm:$0xff] %v571
    %599 = vst [vmem:[#allocation8 + $0x48] sm:$0xff] %v573
    %600 = vst [vmem:[#allocation8 + $0x50] sm:$0xff] %v576
    %601 = vst [vmem:[#allocation8 + $0x58] sm:$0xff] %v578
    %602 = vst [vmem:[#allocation8 + $0x60] sm:$0xff] %v581
    %603 = vst [vmem:[#allocation8 + $0x68] sm:$0xff] %v583
    %604 = vst [vmem:[#allocation8 + $0x70] sm:$0xff] %v586
    %605 = vst [vmem:[#allocation8 + $0x78] sm:$0xff] %v588
    // Predicated region
    $region26: #{tpu_custom_call.1} parent=1 // pred_check
      _
    $region27: #{tpu_custom_call.1} parent=1 // pred_check_branch
      %607 = sbr.rel (0) target = $region29
    $region28: #{tpu_custom_call.1} parent=1 // pred_region
      %609 = vsyncadd [#allocation4], 0
      %s610 = sshll.u32 [#allocation8], 4
      %s611 = int_to_ptr.vmem [resolvable:$true] %s610
      %s612 = sshll.u32 %s3, 4
      %s613 = int_to_ptr.hbm [resolvable:$true] %s612
      %618 = dma.vmem_to_hbm [thread:$0]  %s611, 2048, %s613, [#allocation4], 128, 128, 8
    $region29: #{tpu_custom_call.1} parent=1 // pred_fallthru
      _
    // Predicated region
    $region30: #{tpu_custom_call.1} parent=1 // pred_check
      _
    $region31: #{tpu_custom_call.1} parent=1 // pred_check_branch
      %620 = sbr.rel (0) target = $region33
    $region32: #{tpu_custom_call.1} parent=1 // pred_region
      %622 = dma.done [#allocation4], 2048
    $region33: #{tpu_custom_call.1} parent=1 // pred_fallthru
      _
    %623 = vsyncpa [#allocation3], 1
    %624 = vsyncpa [#allocation6], 1
    %625 = vsyncpa [#allocation4], 1

</llo_original>
